<compile_context>
chip_gen: v5e
topology: v5e:2x2
jax: 0.10.0
libtpu: 0.0.40
codegen_flags: <defaults>
</compile_context>

<pallas_src>
import jax
import jax.numpy as jnp
from jax import lax
from jax.experimental import pallas as pl
from jax.experimental.pallas import tpu as pltpu


def _round_up(v, m):
    return (v + m - 1) // m * m


def lora_kernel(x_ref, w_ref, b_ref, a_ref, bmat_ref, o_ref, acc_ref, t_ref):
    """One (i, j, k) grid step of the fused base-GEMM + LoRA kernel.

    x_ref:    (tm, tk)        activation tile
    w_ref:    (tn, tk)        frozen W tile, PyTorch (out, in) layout
    b_ref:    (1, tn)         bias tile (f32)
    a_ref:    (tn, rank_p)    LoRA A tile (scaling already folded in)
    bmat_ref: (rank_p, tk)    LoRA B tile
    o_ref:    (tm, tn)        output tile
    acc_ref:  (tm, tn) f32    base-GEMM accumulator (scratch)
    t_ref:    (tm, rank_p) f32  x @ B.T accumulator (scratch)
    """
    k = pl.program_id(2)

    @pl.when(k == 0)
    def _init():
        acc_ref[...] = jnp.zeros_like(acc_ref)
        t_ref[...] = jnp.zeros_like(t_ref)

    # Contract last dim of both operands (== A @ B.T without any transpose).
    contract_last = (((1,), (1,)), ((), ()))

    # Base linear partial: x @ W.T
    acc_ref[...] += lax.dot_general(
        x_ref[...], w_ref[...], contract_last,
        preferred_element_type=jnp.float32)

    # LoRA partial (re-associated): t += x @ B.T   -> (tm, rank_p)
    t_ref[...] += lax.dot_general(
        x_ref[...], bmat_ref[...], contract_last,
        preferred_element_type=jnp.float32)

    @pl.when(k == pl.num_programs(2) - 1)
    def _finalize():
        # lora_out = t @ A.T  (scaling was folded into A in the wrapper).
        lora = lax.dot_general(
            t_ref[...], a_ref[...], contract_last,
            preferred_element_type=jnp.float32)
        # Epilogue stays in f32 (bias add + LoRA add), single cast at the end.
        o_ref[...] = (acc_ref[...] + b_ref[...] + lora).astype(o_ref.dtype)


def lora_forward(x, W, bias, A, B, *, alpha, rank,
                 tm_max=256, tn_max=256, tk_max=512):
    """JAX wrapper: flattens leading dims, pads to TPU-friendly tiles, launches."""
    scaling = alpha / rank
    lead = x.shape[:-1]
    in_f = x.shape[-1]
    out_f = W.shape[0]

    x2 = x.reshape(-1, in_f)
    M = x2.shape[0]

    # Tile sizes: sublane dims multiple of 8, lane dims multiple of 128.
    tm = min(tm_max, _round_up(M, 8))
    tn = min(tn_max, _round_up(out_f, 128))
    tk = min(tk_max, _round_up(in_f, 128))
    Mp = _round_up(M, tm)
    Np = _round_up(out_f, tn)
    Kp = _round_up(in_f, tk)
    rank_p = _round_up(rank, 128)

    # Zero-pad operands (zeros contribute nothing to the real outputs).
    xp = jnp.zeros((Mp, Kp), x.dtype).at[:M, :in_f].set(x2)
    Wp = jnp.zeros((Np, Kp), W.dtype).at[:out_f, :in_f].set(W)
    bp = jnp.zeros((1, Np), jnp.float32).at[0, :out_f].set(bias.astype(jnp.float32))
    # Fold the LoRA scaling into A once, outside the kernel.
    Ap = jnp.zeros((Np, rank_p), A.dtype).at[:out_f, :rank].set(
        (A * scaling).astype(A.dtype))
    Bp = jnp.zeros((rank_p, Kp), B.dtype).at[:rank, :in_f].set(B)

    grid = (Mp // tm, Np // tn, Kp // tk)

    out = pl.pallas_call(
        lora_kernel,
        out_shape=jax.ShapeDtypeStruct((Mp, Np), x.dtype),
        grid_spec=pltpu.PrefetchScalarGridSpec(
            num_scalar_prefetch=0,
            grid=grid,
            in_specs=[
                pl.BlockSpec((tm, tk), lambda i, j, k: (i, k)),       # x
                pl.BlockSpec((tn, tk), lambda i, j, k: (j, k)),       # W
                pl.BlockSpec((1, tn), lambda i, j, k: (0, j)),        # bias
                pl.BlockSpec((tn, rank_p), lambda i, j, k: (j, 0)),   # A (k-resident)
                pl.BlockSpec((rank_p, tk), lambda i, j, k: (0, k)),   # B
            ],
            out_specs=pl.BlockSpec((tm, tn), lambda i, j, k: (i, j)),
            scratch_shapes=[
                pltpu.VMEM((tm, tn), jnp.float32),      # base accumulator
                pltpu.VMEM((tm, rank_p), jnp.float32),  # x @ B.T accumulator
            ],
        ),
        compiler_params=pltpu.CompilerParams(
            dimension_semantics=("parallel", "parallel", "arbitrary")),
    )(xp, Wp, bp, Ap, Bp)

    return out[:M, :out_f].reshape(*lead, out_f)


def _kaiming_uniform(key, shape, a=0.1):
    # Deterministic stand-in for nn.init.kaiming_uniform_(..., a=a):
    # bound = sqrt(6 / ((1 + a^2) * fan_in)), fan_in = shape[1]
    fan_in = shape[1]
    bound = (6.0 / ((1.0 + a * a) * fan_in)) ** 0.5
    return jax.random.uniform(key, shape, jnp.float32, minval=-bound, maxval=bound)


if __name__ == "__main__":
    # Small shapes consistent with the module: Linear(in=32, out=32), rank=22.
    batch, seq = 2, 8
    in_features, out_features = 32, 32
    rank, alpha = 22, 0.9

    key = jax.random.PRNGKey(0)
    kx, kw, kb, ka, kbb = jax.random.split(key, 5)

    x = jax.random.normal(kx, (batch, seq, in_features), jnp.float32)

    # Frozen original Linear params (deterministic synthetic init).
    W = _kaiming_uniform(kw, (out_features, in_features), a=5.0 ** 0.5)
    bias = jax.random.uniform(
        kb, (out_features,), jnp.float32,
        minval=-1.0 / in_features ** 0.5, maxval=1.0 / in_features ** 0.5)

    # LoRA params, kaiming_uniform_(a=0.1) as in the module.
    A = _kaiming_uniform(ka, (out_features, rank), a=0.1)
    B = _kaiming_uniform(kbb, (rank, in_features), a=0.1)

    out = lora_forward(x, W, bias, A, B, alpha=alpha, rank=rank)
    out = jax.block_until_ready(out)

    # Pure-JAX reference check (exact PyTorch forward semantics).
    scaling = alpha / rank
    ref = x @ W.T + bias + scaling * (x @ (A @ B).T)
    assert out.shape == (batch, seq, out_features)
    assert jnp.allclose(out, ref, atol=1e-5, rtol=1e-5), "mismatch vs reference"

    print("KERNEL_OK")
</pallas_src>

<mosaic_0001>
module attributes {stable_mosaic.version = 11 : i64} {
  func.func @lora_kernel(%arg0: i32, %arg1: i32, %arg2: i32, %arg3: memref<16x128xf32, #tpu.memory_space<vmem>>, %arg4: memref<128x128xf32, #tpu.memory_space<vmem>>, %arg5: memref<1x128xf32, #tpu.memory_space<vmem>>, %arg6: memref<128x128xf32, #tpu.memory_space<vmem>>, %arg7: memref<128x128xf32, #tpu.memory_space<vmem>>, %arg8: memref<16x128xf32, #tpu.memory_space<vmem>>, %arg9: memref<16x128xf32, #tpu.memory_space<vmem>>, %arg10: memref<16x128xf32, #tpu.memory_space<vmem>>) attributes {dimension_semantics = [#tpu.dimension_semantics<parallel>, #tpu.dimension_semantics<parallel>, #tpu.dimension_semantics<arbitrary>], iteration_bounds = array<i64: 1, 1, 1>, scalar_prefetch = 0 : i64, scratch_operands = 2 : i64, tpu.core_type = #tpu.core_type<tc>, window_params = [{transform_indices = @transform_0, window_bounds = array<i64: 16, 128>}, {transform_indices = @transform_1, window_bounds = array<i64: 128, 128>}, {transform_indices = @transform_2, window_bounds = array<i64: 1, 128>}, {transform_indices = @transform_3, window_bounds = array<i64: 128, 128>}, {transform_indices = @transform_4, window_bounds = array<i64: 128, 128>}, {transform_indices = @transform_5, window_bounds = array<i64: 16, 128>}]} {
    %c0_i32 = arith.constant 0 : i32
    %0 = arith.cmpi eq, %arg2, %c0_i32 : i32
    %1 = arith.extui %0 : i1 to i32
    %c0_i32_0 = arith.constant 0 : i32
    %2 = arith.cmpi ne, %1, %c0_i32_0 : i32
    scf.if %2 {
      %cst_19 = arith.constant 0.000000e+00 : f32
      %18 = vector.broadcast %cst_19 : f32 to vector<16x128xf32>
      %c0_20 = arith.constant 0 : index
      %c0_21 = arith.constant 0 : index
      %19 = vector.load %arg9[%c0_20, %c0_21] : memref<16x128xf32, #tpu.memory_space<vmem>>, vector<16x128xf32>
      tpu.vector_store %arg9[%c0_20, %c0_21], %18 {strides = array<i32>} : memref<16x128xf32, #tpu.memory_space<vmem>>, vector<16x128xf32>,
      %cst_22 = arith.constant 0.000000e+00 : f32
      %20 = vector.broadcast %cst_22 : f32 to vector<16x128xf32>
      %c0_23 = arith.constant 0 : index
      %c0_24 = arith.constant 0 : index
      %21 = vector.load %arg10[%c0_23, %c0_24] : memref<16x128xf32, #tpu.memory_space<vmem>>, vector<16x128xf32>
      tpu.vector_store %arg10[%c0_23, %c0_24], %20 {strides = array<i32>} : memref<16x128xf32, #tpu.memory_space<vmem>>, vector<16x128xf32>,
    } else {
    }
    %c0 = arith.constant 0 : index
    %c0_1 = arith.constant 0 : index
    %3 = vector.load %arg9[%c0, %c0_1] : memref<16x128xf32, #tpu.memory_space<vmem>>, vector<16x128xf32>
    %c0_2 = arith.constant 0 : index
    %c0_3 = arith.constant 0 : index
    %4 = vector.load %arg3[%c0_2, %c0_3] : memref<16x128xf32, #tpu.memory_space<vmem>>, vector<16x128xf32>
    %c0_4 = arith.constant 0 : index
    %c0_5 = arith.constant 0 : index
    %5 = vector.load %arg4[%c0_4, %c0_5] : memref<128x128xf32, #tpu.memory_space<vmem>>, vector<128x128xf32>
    %cst = arith.constant dense<0.000000e+00> : vector<16x128xf32>
    %6 = tpu.matmul %4, %5, %cst {dimension_numbers = #tpu.dot_dimension_numbers<[1], [1], [0], [0], [0, 0, 1, 0], [], []>} : vector<16x128xf32>, vector<128x128xf32>, vector<16x128xf32> -> vector<16x128xf32>
    %7 = arith.addf %3, %6 : vector<16x128xf32>
    %c0_6 = arith.constant 0 : index
    %c0_7 = arith.constant 0 : index
    %8 = vector.load %arg9[%c0_6, %c0_7] : memref<16x128xf32, #tpu.memory_space<vmem>>, vector<16x128xf32>
    tpu.vector_store %arg9[%c0_6, %c0_7], %7 {strides = array<i32>} : memref<16x128xf32, #tpu.memory_space<vmem>>, vector<16x128xf32>,
    %c0_8 = arith.constant 0 : index
    %c0_9 = arith.constant 0 : index
    %9 = vector.load %arg10[%c0_8, %c0_9] : memref<16x128xf32, #tpu.memory_space<vmem>>, vector<16x128xf32>
    %c0_10 = arith.constant 0 : index
    %c0_11 = arith.constant 0 : index
    %10 = vector.load %arg3[%c0_10, %c0_11] : memref<16x128xf32, #tpu.memory_space<vmem>>, vector<16x128xf32>
    %c0_12 = arith.constant 0 : index
    %c0_13 = arith.constant 0 : index
    %11 = vector.load %arg7[%c0_12, %c0_13] : memref<128x128xf32, #tpu.memory_space<vmem>>, vector<128x128xf32>
    %cst_14 = arith.constant dense<0.000000e+00> : vector<16x128xf32>
    %12 = tpu.matmul %10, %11, %cst_14 {dimension_numbers = #tpu.dot_dimension_numbers<[1], [1], [0], [0], [0, 0, 1, 0], [], []>} : vector<16x128xf32>, vector<128x128xf32>, vector<16x128xf32> -> vector<16x128xf32>
    %13 = arith.addf %9, %12 : vector<16x128xf32>
    %c0_15 = arith.constant 0 : index
    %c0_16 = arith.constant 0 : index
    %14 = vector.load %arg10[%c0_15, %c0_16] : memref<16x128xf32, #tpu.memory_space<vmem>>, vector<16x128xf32>
    tpu.vector_store %arg10[%c0_15, %c0_16], %13 {strides = array<i32>} : memref<16x128xf32, #tpu.memory_space<vmem>>, vector<16x128xf32>,
    %c0_i32_17 = arith.constant 0 : i32
    %15 = arith.cmpi eq, %arg2, %c0_i32_17 : i32
    %16 = arith.extui %15 : i1 to i32
    %c0_i32_18 = arith.constant 0 : i32
    %17 = arith.cmpi ne, %16, %c0_i32_18 : i32
    scf.if %17 {
      %c0_19 = arith.constant 0 : index
      %c0_20 = arith.constant 0 : index
      %18 = vector.load %arg10[%c0_19, %c0_20] : memref<16x128xf32, #tpu.memory_space<vmem>>, vector<16x128xf32>
      %c0_21 = arith.constant 0 : index
      %c0_22 = arith.constant 0 : index
      %19 = vector.load %arg6[%c0_21, %c0_22] : memref<128x128xf32, #tpu.memory_space<vmem>>, vector<128x128xf32>
      %cst_23 = arith.constant dense<0.000000e+00> : vector<16x128xf32>
      %20 = tpu.matmul %18, %19, %cst_23 {dimension_numbers = #tpu.dot_dimension_numbers<[1], [1], [0], [0], [0, 0, 1, 0], [], []>} : vector<16x128xf32>, vector<128x128xf32>, vector<16x128xf32> -> vector<16x128xf32>
      %c0_24 = arith.constant 0 : index
      %c0_25 = arith.constant 0 : index
      %21 = vector.load %arg9[%c0_24, %c0_25] : memref<16x128xf32, #tpu.memory_space<vmem>>, vector<16x128xf32>
      %c0_26 = arith.constant 0 : index
      %c0_27 = arith.constant 0 : index
      %22 = vector.load %arg5[%c0_26, %c0_27] : memref<1x128xf32, #tpu.memory_space<vmem>>, vector<1x128xf32>
      %23 = vector.broadcast %22 : vector<1x128xf32> to vector<16x128xf32>
      %24 = arith.addf %21, %23 : vector<16x128xf32>
      %25 = arith.addf %24, %20 : vector<16x128xf32>
      %c0_28 = arith.constant 0 : index
      %c0_29 = arith.constant 0 : index
      %26 = vector.load %arg8[%c0_28, %c0_29] : memref<16x128xf32, #tpu.memory_space<vmem>>, vector<16x128xf32>
      tpu.vector_store %arg8[%c0_28, %c0_29], %25 {strides = array<i32>} : memref<16x128xf32, #tpu.memory_space<vmem>>, vector<16x128xf32>,
    } else {
    }
    return
  }
  func.func @transform_0(%arg0: i32, %arg1: i32, %arg2: i32) -> (i32, i32) {
    %c0_i32 = arith.constant 0 : i32
    return %arg0, %arg2 : i32, i32
  }
  func.func @transform_1(%arg0: i32, %arg1: i32, %arg2: i32) -> (i32, i32) {
    %c0_i32 = arith.constant 0 : i32
    return %arg1, %arg2 : i32, i32
  }
  func.func @transform_2(%arg0: i32, %arg1: i32, %arg2: i32) -> (i32, i32) {
    %c0_i32 = arith.constant 0 : i32
    %c0_i32_0 = arith.constant 0 : i32
    return %c0_i32, %arg1 : i32, i32
  }
  func.func @transform_3(%arg0: i32, %arg1: i32, %arg2: i32) -> (i32, i32) {
    %c0_i32 = arith.constant 0 : i32
    %c0_i32_0 = arith.constant 0 : i32
    return %arg1, %c0_i32 : i32, i32
  }
  func.func @transform_4(%arg0: i32, %arg1: i32, %arg2: i32) -> (i32, i32) {
    %c0_i32 = arith.constant 0 : i32
    %c0_i32_0 = arith.constant 0 : i32
    return %c0_i32, %arg2 : i32, i32
  }
  func.func @transform_5(%arg0: i32, %arg1: i32, %arg2: i32) -> (i32, i32) {
    %c0_i32 = arith.constant 0 : i32
    return %arg0, %arg1 : i32, i32
  }
}

</mosaic_0001>

<llo_original>
// kernel: tpu_custom_call.1
$region0: #{tpu_custom_call.1}
  #allocation0 [shape = 'u32[]', space=smem, size = 0x4, offset = 0x4, fixed_abs, tag = 'smem constant byte address 0x4 - core index']
  #allocation1 [shape = 'u32[72,128]{1,0:T(1,128)}', space=vmem, size = 0x9000, scoped, tag = 'internal scratch']
  #allocation2 [shape = 'f32[16,128]{1,0:T(8,128)}', space=vmem, size = 0x2000, scoped, tag = 'scratch operand']
  #allocation3 [shape = 'f32[16,128]{1,0:T(8,128)}', space=vmem, size = 0x2000, scoped, tag = 'scratch operand']
  %s0 = inlined_call_operand.hbm [shape: f32[16,128], index: 0, kind: input, shape index: {}]
  %s1 = inlined_call_operand.hbm [shape: f32[128,128], index: 1, kind: input, shape index: {}]
  %s2 = inlined_call_operand.vmem [shape: f32[1,128], index: 2, kind: input, shape index: {}]
  %s3 = inlined_call_operand.hbm [shape: f32[128,128], index: 3, kind: input, shape index: {}]
  %s4 = inlined_call_operand.hbm [shape: f32[128,128], index: 4, kind: input, shape index: {}]
  %s5 = inlined_call_operand.hbm [shape: f32[16,128], index: 5, kind: output, shape index: {}]
  %s6 = sld [smem:[#allocation0]]
  $region54: #{tpu_custom_call.1} parent=0
    _
  %s8 = ssub.s32 1, %s6
  %s9 = scalar_select 0, %s8, %s6
  $region1: #{tpu_custom_call.1} parent=0
    #allocation4 [shape = 'u8[8192]{0}', space=vmem, size = 0x2000, scoped, tag = 'input window, operand 0, single buffered']
    #allocation5 [shape = 's32[1]{0}', space=sflag, size = 0x4, scoped, tag = 'scoped memory for tpu_custom_call.1']
    #allocation6 [shape = 's32[1]{0}', space=sflag, size = 0x4, scoped, tag = 'scoped memory for tpu_custom_call.1']
    #allocation7 [shape = 'u8[65536]{0}', space=vmem, size = 0x10000, scoped, tag = 'input window, operand 1, single buffered']
    #allocation8 [shape = 's32[1]{0}', space=sflag, size = 0x4, scoped, tag = 'scoped memory for tpu_custom_call.1']
    #allocation9 [shape = 'u8[65536]{0}', space=vmem, size = 0x10000, scoped, tag = 'input window, operand 3, single buffered']
    #allocation10 [shape = 'u8[65536]{0}', space=vmem, size = 0x10000, scoped, tag = 'input window, operand 4, single buffered']
    #allocation11 [shape = 's32[1]{0}', space=sflag, size = 0x4, scoped, tag = 'scoped memory for tpu_custom_call.1']
    #allocation12 [shape = 'u8[8192]{0}', space=vmem, size = 0x2000, scoped, tag = 'output window, operand 0, single buffered']
    %10 = vsyncpa [#allocation5], 0
    %11 = vsyncpa [#allocation8], 0
    %12 = vsyncpa [#allocation11], 0
    %13 = vsyncpa [#allocation6], 0
    // Predicated region
    $region2: #{tpu_custom_call.1} parent=1 // pred_check
      _
    $region3: #{tpu_custom_call.1} parent=1 // pred_check_branch
      %15 = sbr.rel (0) target = $region5
    $region4: #{tpu_custom_call.1} parent=1 // pred_region
      %17 = vsyncadd [#allocation5], 0
      %s18 = sshll.u32 %s0, 4
      %s19 = int_to_ptr.hbm [resolvable:$true] %s18
      %s20 = sshll.u32 [#allocation4], 4
      %s21 = int_to_ptr.vmem [resolvable:$true] %s20
      %26 = dma.hbm_to_vmem [thread:$0]  %s19, 256, %s21, [#allocation5], 128, 128, 8
    $region5: #{tpu_custom_call.1} parent=1 // pred_fallthru
      _
    // Predicated region
    $region6: #{tpu_custom_call.1} parent=1 // pred_check
      _
    $region7: #{tpu_custom_call.1} parent=1 // pred_check_branch
      %28 = sbr.rel (0) target = $region9
    $region8: #{tpu_custom_call.1} parent=1 // pred_region
      %30 = vsyncadd [#allocation8], 0
      %s31 = sshll.u32 %s1, 4
      %s32 = int_to_ptr.hbm [resolvable:$true] %s31
      %s33 = sshll.u32 [#allocation7], 4
      %s34 = int_to_ptr.vmem [resolvable:$true] %s33
      %39 = dma.hbm_to_vmem [thread:$0]  %s32, 2048, %s34, [#allocation8], 128, 128, 8
    $region9: #{tpu_custom_call.1} parent=1 // pred_fallthru
      _
    // Predicated region
    $region10: #{tpu_custom_call.1} parent=1 // pred_check
      _
    $region11: #{tpu_custom_call.1} parent=1 // pred_check_branch
      %41 = sbr.rel (0) target = $region13
    $region12: #{tpu_custom_call.1} parent=1 // pred_region
      _
    $region13: #{tpu_custom_call.1} parent=1 // pred_fallthru
      _
    // Predicated region
    $region14: #{tpu_custom_call.1} parent=1 // pred_check
      _
    $region15: #{tpu_custom_call.1} parent=1 // pred_check_branch
      %43 = sbr.rel (0) target = $region17
    $region16: #{tpu_custom_call.1} parent=1 // pred_region
      %45 = vsyncadd [#allocation8], 0
      %s46 = sshll.u32 %s3, 4
      %s47 = int_to_ptr.hbm [resolvable:$true] %s46
      %s48 = sshll.u32 [#allocation9], 4
      %s49 = int_to_ptr.vmem [resolvable:$true] %s48
      %54 = dma.hbm_to_vmem [thread:$0]  %s47, 2048, %s49, [#allocation8], 128, 128, 8
    $region17: #{tpu_custom_call.1} parent=1 // pred_fallthru
      _
    // Predicated region
    $region18: #{tpu_custom_call.1} parent=1 // pred_check
      _
    $region19: #{tpu_custom_call.1} parent=1 // pred_check_branch
      %56 = sbr.rel (0) target = $region21
    $region20: #{tpu_custom_call.1} parent=1 // pred_region
      %58 = vsyncadd [#allocation11], 0
      %s59 = sshll.u32 %s4, 4
      %s60 = int_to_ptr.hbm [resolvable:$true] %s59
      %s61 = sshll.u32 [#allocation10], 4
      %s62 = int_to_ptr.vmem [resolvable:$true] %s61
      %67 = dma.hbm_to_vmem [thread:$0]  %s60, 2048, %s62, [#allocation11], 128, 128, 8
    $region21: #{tpu_custom_call.1} parent=1 // pred_fallthru
      _
    // Predicated region
    $region22: #{tpu_custom_call.1} parent=1 // pred_check
      _
    $region23: #{tpu_custom_call.1} parent=1 // pred_check_branch
      %69 = sbr.rel (0) target = $region25
    $region24: #{tpu_custom_call.1} parent=1 // pred_region
      %71 = dma.done [#allocation5], 256
    $region25: #{tpu_custom_call.1} parent=1 // pred_fallthru
      _
    // Predicated region
    $region26: #{tpu_custom_call.1} parent=1 // pred_check
      _
    $region27: #{tpu_custom_call.1} parent=1 // pred_check_branch
      %73 = sbr.rel (0) target = $region29
    $region28: #{tpu_custom_call.1} parent=1 // pred_region
      %75 = dma.done [#allocation8], 2048
    $region29: #{tpu_custom_call.1} parent=1 // pred_fallthru
      _
    // Predicated region
    $region30: #{tpu_custom_call.1} parent=1 // pred_check
      _
    $region31: #{tpu_custom_call.1} parent=1 // pred_check_branch
      %77 = sbr.rel (0) target = $region33
    $region32: #{tpu_custom_call.1} parent=1 // pred_region
      %79 = dma.done [#allocation8], 2048
    $region33: #{tpu_custom_call.1} parent=1 // pred_fallthru
      _
    // Predicated region
    $region34: #{tpu_custom_call.1} parent=1 // pred_check
      _
    $region35: #{tpu_custom_call.1} parent=1 // pred_check_branch
      %81 = sbr.rel (0) target = $region37
    $region36: #{tpu_custom_call.1} parent=1 // pred_region
      %83 = dma.done [#allocation11], 2048
    $region37: #{tpu_custom_call.1} parent=1 // pred_fallthru
      _
    %p84 = scmp.eq.s32.totalorder 0, 0
    // Predicated region
    $region38: #{tpu_custom_call.1} parent=1 // pred_check
      %p85 = pneg %p84
    $region39: #{tpu_custom_call.1} parent=1 // pred_check_branch
      %87 = sbr.rel (%p85) target = $region41
    $region40: #{tpu_custom_call.1} parent=1 // pred_region
      %88 = vst [vmem:[#allocation2] sm:$0xff] 0.0
      %89 = vst [vmem:[#allocation2 + $0x8] sm:$0xff] 0.0
      %90 = vst [vmem:[#allocation3] sm:$0xff] 0.0
      %91 = vst [vmem:[#allocation3 + $0x8] sm:$0xff] 0.0
    $region41: #{tpu_custom_call.1} parent=1 // pred_fallthru
      _
    %v92 = vld [vmem:[#allocation2] sm:$0xff]
    %v93 = vld [vmem:[#allocation2 + $0x8] sm:$0xff]
    %v94 = vld [vmem:[#allocation4] sm:$0xff]
    %v95 = vld [vmem:[#allocation4 + $0x8] sm:$0xff]
    %v96 = vld [vmem:[#allocation7] sm:$0xff]
    %v97 = vld [vmem:[#allocation7 + $0x8] sm:$0xff]
    %v98 = vld [vmem:[#allocation7 + $0x10] sm:$0xff]
    %v99 = vld [vmem:[#allocation7 + $0x18] sm:$0xff]
    %v100 = vld [vmem:[#allocation7 + $0x20] sm:$0xff]
    %v101 = vld [vmem:[#allocation7 + $0x28] sm:$0xff]
    %v102 = vld [vmem:[#allocation7 + $0x30] sm:$0xff]
    %v103 = vld [vmem:[#allocation7 + $0x38] sm:$0xff]
    %v104 = vld [vmem:[#allocation7 + $0x40] sm:$0xff]
    %v105 = vld [vmem:[#allocation7 + $0x48] sm:$0xff]
    %v106 = vld [vmem:[#allocation7 + $0x50] sm:$0xff]
    %v107 = vld [vmem:[#allocation7 + $0x58] sm:$0xff]
    %v108 = vld [vmem:[#allocation7 + $0x60] sm:$0xff]
    %v109 = vld [vmem:[#allocation7 + $0x68] sm:$0xff]
    %v110 = vld [vmem:[#allocation7 + $0x70] sm:$0xff]
    %v111 = vld [vmem:[#allocation7 + $0x78] sm:$0xff]
    %112 = vmatpush.xpose.msra.mxu0 %v111
    %113 = vmatpush.xpose.msra.mxu0 %v110
    %114 = vmatpush.xpose.msra.mxu0 %v109
    %115 = vmatpush.xpose.msra.mxu0 %v108
    %116 = vmatpush.xpose.msra.mxu0 %v107
    %117 = vmatpush.xpose.msra.mxu0 %v106
    %118 = vmatpush.xpose.msra.mxu0 %v105
    %119 = vmatpush.xpose.msra.mxu0 %v104
    %120 = vmatpush.xpose.msra.mxu0 %v103
    %121 = vmatpush.xpose.msra.mxu0 %v102
    %122 = vmatpush.xpose.msra.mxu0 %v101
    %123 = vmatpush.xpose.msra.mxu0 %v100
    %124 = vmatpush.xpose.msra.mxu0 %v99
    %125 = vmatpush.xpose.msra.mxu0 %v98
    %126 = vmatpush.xpose.msra.mxu0 %v97
    %127 = vmatpush.xpose.msra.mxu0 %v96
    %128 = vmatmul.f32.gmra.mxu0 %v94
    %v129 = vpop.f32.mrf.mxu0
    %v130 = vadd.f32 0.0, %v129
    %131 = vmatmul.f32.gmra.mxu0 %v95
    %v132 = vpop.f32.mrf.mxu0
    %v133 = vadd.f32 0.0, %v132
    %134 = vdwg.mxu0
    %v135 = vadd.f32 %v92, %v130
    %v136 = vadd.f32 %v93, %v133
    %137 = vst [vmem:[#allocation2] sm:$0xff] %v135
    %138 = vst [vmem:[#allocation2 + $0x8] sm:$0xff] %v136
    %v139 = vld [vmem:[#allocation3] sm:$0xff]
    %v140 = vld [vmem:[#allocation3 + $0x8] sm:$0xff]
    %v141 = vld [vmem:[#allocation4] sm:$0xff]
    %v142 = vld [vmem:[#allocation4 + $0x8] sm:$0xff]
    %v143 = vld [vmem:[#allocation10] sm:$0xff]
    %v144 = vld [vmem:[#allocation10 + $0x8] sm:$0xff]
    %v145 = vld [vmem:[#allocation10 + $0x10] sm:$0xff]
    %v146 = vld [vmem:[#allocation10 + $0x18] sm:$0xff]
    %v147 = vld [vmem:[#allocation10 + $0x20] sm:$0xff]
    %v148 = vld [vmem:[#allocation10 + $0x28] sm:$0xff]
    %v149 = vld [vmem:[#allocation10 + $0x30] sm:$0xff]
    %v150 = vld [vmem:[#allocation10 + $0x38] sm:$0xff]
    %v151 = vld [vmem:[#allocation10 + $0x40] sm:$0xff]
    %v152 = vld [vmem:[#allocation10 + $0x48] sm:$0xff]
    %v153 = vld [vmem:[#allocation10 + $0x50] sm:$0xff]
    %v154 = vld [vmem:[#allocation10 + $0x58] sm:$0xff]
    %v155 = vld [vmem:[#allocation10 + $0x60] sm:$0xff]
    %v156 = vld [vmem:[#allocation10 + $0x68] sm:$0xff]
    %v157 = vld [vmem:[#allocation10 + $0x70] sm:$0xff]
    %v158 = vld [vmem:[#allocation10 + $0x78] sm:$0xff]
    %159 = vmatpush.xpose.msra.mxu0 %v158
    %160 = vmatpush.xpose.msra.mxu0 %v157
    %161 = vmatpush.xpose.msra.mxu0 %v156
    %162 = vmatpush.xpose.msra.mxu0 %v155
    %163 = vmatpush.xpose.msra.mxu0 %v154
    %164 = vmatpush.xpose.msra.mxu0 %v153
    %165 = vmatpush.xpose.msra.mxu0 %v152
    %166 = vmatpush.xpose.msra.mxu0 %v151
    %167 = vmatpush.xpose.msra.mxu0 %v150
    %168 = vmatpush.xpose.msra.mxu0 %v149
    %169 = vmatpush.xpose.msra.mxu0 %v148
    %170 = vmatpush.xpose.msra.mxu0 %v147
    %171 = vmatpush.xpose.msra.mxu0 %v146
    %172 = vmatpush.xpose.msra.mxu0 %v145
    %173 = vmatpush.xpose.msra.mxu0 %v144
    %174 = vmatpush.xpose.msra.mxu0 %v143
    %175 = vmatmul.f32.gmra.mxu0 %v141
    %v176 = vpop.f32.mrf.mxu0
    %v177 = vadd.f32 0.0, %v176
    %178 = vmatmul.f32.gmra.mxu0 %v142
    %v179 = vpop.f32.mrf.mxu0
    %v180 = vadd.f32 0.0, %v179
    %181 = vdwg.mxu0
    %v182 = vadd.f32 %v139, %v177
    %v183 = vadd.f32 %v140, %v180
    %184 = vst [vmem:[#allocation3] sm:$0xff] %v182
    %185 = vst [vmem:[#allocation3 + $0x8] sm:$0xff] %v183
    // Predicated region
    $region42: #{tpu_custom_call.1} parent=1 // pred_check
      %p186 = pneg %p84
    $region43: #{tpu_custom_call.1} parent=1 // pred_check_branch
      %188 = sbr.rel (%p186) target = $region45
    $region44: #{tpu_custom_call.1} parent=1 // pred_region
      %v189 = vld [vmem:[#allocation3] sm:$0xff]
      %v190 = vld [vmem:[#allocation3 + $0x8] sm:$0xff]
      %v191 = vld [vmem:[#allocation9] sm:$0xff]
      %v192 = vld [vmem:[#allocation9 + $0x8] sm:$0xff]
      %v193 = vld [vmem:[#allocation9 + $0x10] sm:$0xff]
      %v194 = vld [vmem:[#allocation9 + $0x18] sm:$0xff]
      %v195 = vld [vmem:[#allocation9 + $0x20] sm:$0xff]
      %v196 = vld [vmem:[#allocation9 + $0x28] sm:$0xff]
      %v197 = vld [vmem:[#allocation9 + $0x30] sm:$0xff]
      %v198 = vld [vmem:[#allocation9 + $0x38] sm:$0xff]
      %v199 = vld [vmem:[#allocation9 + $0x40] sm:$0xff]
      %v200 = vld [vmem:[#allocation9 + $0x48] sm:$0xff]
      %v201 = vld [vmem:[#allocation9 + $0x50] sm:$0xff]
      %v202 = vld [vmem:[#allocation9 + $0x58] sm:$0xff]
      %v203 = vld [vmem:[#allocation9 + $0x60] sm:$0xff]
      %v204 = vld [vmem:[#allocation9 + $0x68] sm:$0xff]
      %v205 = vld [vmem:[#allocation9 + $0x70] sm:$0xff]
      %v206 = vld [vmem:[#allocation9 + $0x78] sm:$0xff]
      %207 = vmatpush.xpose.msra.mxu0 %v206
      %208 = vmatpush.xpose.msra.mxu0 %v205
      %209 = vmatpush.xpose.msra.mxu0 %v204
      %210 = vmatpush.xpose.msra.mxu0 %v203
      %211 = vmatpush.xpose.msra.mxu0 %v202
      %212 = vmatpush.xpose.msra.mxu0 %v201
      %213 = vmatpush.xpose.msra.mxu0 %v200
      %214 = vmatpush.xpose.msra.mxu0 %v199
      %215 = vmatpush.xpose.msra.mxu0 %v198
      %216 = vmatpush.xpose.msra.mxu0 %v197
      %217 = vmatpush.xpose.msra.mxu0 %v196
      %218 = vmatpush.xpose.msra.mxu0 %v195
      %219 = vmatpush.xpose.msra.mxu0 %v194
      %220 = vmatpush.xpose.msra.mxu0 %v193
      %221 = vmatpush.xpose.msra.mxu0 %v192
      %222 = vmatpush.xpose.msra.mxu0 %v191
      %223 = vmatmul.f32.gmra.mxu0 %v189
      %v224 = vpop.f32.mrf.mxu0
      %v225 = vadd.f32 0.0, %v224
      %226 = vmatmul.f32.gmra.mxu0 %v190
      %v227 = vpop.f32.mrf.mxu0
      %v228 = vadd.f32 0.0, %v227
      %229 = vdwg.mxu0
      %v230 = vld [vmem:[#allocation2] sm:$0xff]
      %v231 = vld [vmem:[#allocation2 + $0x8] sm:$0xff]
      %v232 = vld [vmem:[%s2] sm:$0x1]
      %v234 = vperm.slane %v232, 0
      %v236 = vadd.f32 %v230, %v234
      %v237 = vadd.f32 %v231, %v234
      %v238 = vadd.f32 %v236, %v225
      %v239 = vadd.f32 %v237, %v228
      %240 = vst [vmem:[#allocation12] sm:$0xff] %v238
      %241 = vst [vmem:[#allocation12 + $0x8] sm:$0xff] %v239
    $region45: #{tpu_custom_call.1} parent=1 // pred_fallthru
      _
    // Predicated region
    $region46: #{tpu_custom_call.1} parent=1 // pred_check
      _
    $region47: #{tpu_custom_call.1} parent=1 // pred_check_branch
      %243 = sbr.rel (0) target = $region49
    $region48: #{tpu_custom_call.1} parent=1 // pred_region
      %245 = vsyncadd [#allocation6], 0
      %s246 = sshll.u32 [#allocation12], 4
      %s247 = int_to_ptr.vmem [resolvable:$true] %s246
      %s248 = sshll.u32 %s5, 4
      %s249 = int_to_ptr.hbm [resolvable:$true] %s248
      %254 = dma.vmem_to_hbm [thread:$0]  %s247, 256, %s249, [#allocation6], 128, 128, 8
    $region49: #{tpu_custom_call.1} parent=1 // pred_fallthru
      _
    // Predicated region
    $region50: #{tpu_custom_call.1} parent=1 // pred_check
      _
    $region51: #{tpu_custom_call.1} parent=1 // pred_check_branch
      %256 = sbr.rel (0) target = $region53
    $region52: #{tpu_custom_call.1} parent=1 // pred_region
      %258 = dma.done [#allocation6], 256
    $region53: #{tpu_custom_call.1} parent=1 // pred_fallthru
      _
    %259 = vsyncpa [#allocation5], 1
    %260 = vsyncpa [#allocation8], 1
    %261 = vsyncpa [#allocation11], 1
    %262 = vsyncpa [#allocation6], 1

</llo_original>
